<compile_context>
chip_gen: v7x
topology: tpu7x:2x2x1
jax: 0.10.0
libtpu: 0.0.40
codegen_flags: <defaults>
</compile_context>

<pallas_src>
import math
from functools import partial

import jax
import jax.numpy as jnp
from jax import lax
from jax.experimental import pallas as pl
from jax.experimental.pallas import tpu as pltpu


# --------------------------------------------------------------------------- kernels
_QKV_DNUMS = (((1,), (1,)), ((), ()))  # contract K on both operands: x(tm,tk) . w(tn,tk)^T


def _qkv_kernel_fullk(x_ref, w_ref, o_ref):
    """Single-shot full-K tile: o = x @ W^T, f32 accumulation on the MXU."""
    o_ref[...] = lax.dot_general(
        x_ref[...], w_ref[...],
        dimension_numbers=_QKV_DNUMS,
        preferred_element_type=jnp.float32,
    ).astype(o_ref.dtype)


def _qkv_kernel_splitk(x_ref, w_ref, o_ref, acc_ref):
    """K-innermost reduction into an f32 VMEM accumulator."""
    @pl.when(pl.program_id(2) == 0)
    def _():
        acc_ref[...] = jnp.zeros_like(acc_ref)

    acc_ref[...] += lax.dot_general(
        x_ref[...], w_ref[...],
        dimension_numbers=_QKV_DNUMS,
        preferred_element_type=jnp.float32,
    )

    @pl.when(pl.program_id(2) == pl.num_programs(2) - 1)
    def _():
        o_ref[...] = acc_ref[...].astype(o_ref.dtype)


# --------------------------------------------------------------------------- tiling helpers
def _round_up(x: int, m: int) -> int:
    return ((x + m - 1) // m) * m


def _pick_tile(dim: int, preferred: int, align: int) -> int:
    """Largest multiple of `align` that divides `dim` and is <= `preferred`.
    Falls back to the full dimension (a full-dim block is always legal)."""
    if dim <= preferred or dim % align != 0:
        return dim
    t = (preferred // align) * align
    while dim % t != 0:
        t -= align
    return max(t, align)


def _vmem_budget_bytes():
    """(working-set budget, vmem_limit_bytes) sized for the actual chip.
    v7x has 64 MiB VMEM per TC; v5e/v6e have 128 MiB."""
    cap = 64 * 1024 * 1024  # conservative default (v7x per-TC)
    try:
        cap = int(pltpu.get_tpu_info().vmem_capacity_bytes)
    except Exception:
        pass
    budget = min(int(cap * 0.7), 80 * 1024 * 1024)
    limit = min(cap - 16 * 1024 * 1024, budget + 16 * 1024 * 1024)
    return budget, max(limit, budget)


# --------------------------------------------------------------------------- projection
def qkv_projection(x_2d, w, *, out_dtype):
    """Fused q/k/v projection: (M, E) @ (3E, E)^T -> (M, 3E), lane-dense slab.

    `w` stays in PyTorch nn.Linear layout (3E, E); no HBM transpose is made."""
    M, K = x_2d.shape
    N, K2 = w.shape
    assert K == K2, (K, K2)

    itemsize = jnp.dtype(x_2d.dtype).itemsize
    out_itemsize = jnp.dtype(out_dtype).itemsize
    sub_align = 16 if itemsize == 2 else 8           # bf16 min tile (16,128); f32 (8,128)
    preferred_mn = 1024 if itemsize == 2 else 512    # big tiles -> high arithmetic intensity

    budget, vmem_limit = _vmem_budget_bytes()

    # Lane-dense output tile (multiple of 128 or full N).
    tn = _pick_tile(N, preferred_mn, 128)

    def working_set(tm_, tk_, with_acc):
        b = 2 * (tm_ * tk_ + tn * tk_) * itemsize + 2 * tm_ * tn * out_itemsize
        if with_acc:
            b += tm_ * tn * 4
        return b

    # Row tile: sublane-aligned, capped by the preferred size.
    tm = min(preferred_mn, _round_up(M, sub_align))
    tm = max(sub_align, (tm // sub_align) * sub_align)

    # Prefer full-K (no reduction axis, no accumulator scratch, no init/finalize).
    if working_set(tm, K, False) <= budget:
        split_k, tk = False, K
    else:
        split_k = True
        tk = _pick_tile(K, 2048 if itemsize == 2 else 1024, 128)
        while working_set(tm, tk, True) > budget and tm > sub_align:
            tm = max(sub_align, (tm // 2 // sub_align) * sub_align)

    # Pad M so the grid divides evenly (keeps VMEM O(tile) and stores unmasked).
    M_pad = _round_up(M, tm)
    if M_pad != M:
        x_2d = jnp.pad(x_2d, ((0, M_pad - M), (0, 0)))
    grid_m, grid_n = M_pad // tm, N // tn

    cost = pl.CostEstimate(
        flops=2 * M_pad * N * K,
        transcendentals=0,
        bytes_accessed=(M_pad * K * itemsize) * grid_n      # x re-read per N tile
                       + (N * K * itemsize) * grid_m        # w re-read per M tile
                       + M_pad * N * out_itemsize,          # output written once
    )

    if not split_k:
        kernel = _qkv_kernel_fullk
        grid = (grid_m, grid_n)
        in_specs = [
            pl.BlockSpec((tm, K), lambda i, j: (i, 0)),      # x row panel
            pl.BlockSpec((tn, K), lambda i, j: (j, 0)),      # W kept (3E, E): no transpose
        ]
        out_specs = pl.BlockSpec((tm, tn), lambda i, j: (i, j))
        scratch = []
        dims = ("parallel", "parallel")
    else:
        kernel = _qkv_kernel_splitk
        grid = (grid_m, grid_n, max(K // tk, 1))
        in_specs = [
            pl.BlockSpec((tm, tk), lambda i, j, k: (i, k)),
            pl.BlockSpec((tn, tk), lambda i, j, k: (j, k)),
        ]
        out_specs = pl.BlockSpec((tm, tn), lambda i, j, k: (i, j))
        scratch = [pltpu.VMEM((tm, tn), jnp.float32)]        # f32 accumulator
        dims = ("parallel", "parallel", "arbitrary")

    out = pl.pallas_call(
        kernel,
        out_shape=jax.ShapeDtypeStruct((M_pad, N), out_dtype),
        grid_spec=pltpu.PrefetchScalarGridSpec(
            num_scalar_prefetch=0,
            grid=grid,
            in_specs=in_specs,
            out_specs=out_specs,
            scratch_shapes=scratch,
        ),
        compiler_params=pltpu.CompilerParams(
            dimension_semantics=dims,
            vmem_limit_bytes=int(vmem_limit),
        ),
        cost_estimate=cost,
    )(x_2d, w)

    return out[:M] if M_pad != M else out


# --------------------------------------------------------------------------- wrapper
def linear_premix_forward(x, w_qkv, heads, *, compute_dtype=jnp.float32):
    """x: (B, S, E); w_qkv: (3E, E) in PyTorch nn.Linear weight layout.
    Returns q, k, v each of shape (B, heads, S, d_k)."""
    B, S, E = x.shape
    assert E % heads == 0, "embed_dim must be divisible by heads"
    d_k = E // heads
    M = B * S
    out_dtype = x.dtype

    x_2d = x.reshape(M, E)
    if compute_dtype != x.dtype:
        # Cast in the wrapper (not per-tile in the kernel): halves HBM traffic and
        # per-buffer VMEM for the DMA'd blocks, removes a per-step VPU cast.
        x_2d = x_2d.astype(compute_dtype)
        w = w_qkv.astype(compute_dtype)
    else:
        w = w_qkv

    qkv = qkv_projection(x_2d, w, out_dtype=out_dtype)     # (M, 3E) lane-dense slab
    qkv = qkv.reshape(B, S, 3 * E)
    q, k, v = jnp.split(qkv, 3, axis=-1)                   # == torch.chunk(3, dim=-1)

    def to_heads(t):                                       # layout plumbing only
        return jnp.swapaxes(t.reshape(B, S, heads, d_k), 1, 2)

    # TODO(synk): when d_k % 128 == 0, emit a (3, B, H, S, d_k) out_shape directly
    # from the kernel via out_specs to skip these post-kernel HBM passes; for
    # d_k < 128 the flat slab keeps the stores lane-dense (unmasked vst).
    return to_heads(q), to_heads(k), to_heads(v)


def linear_premix_reference(x, w_qkv, heads):
    B, S, E = x.shape
    d_k = E // heads
    qkv = x @ w_qkv.T
    q, k, v = jnp.split(qkv, 3, axis=-1)

    def to_heads(t):
        return jnp.swapaxes(t.reshape(B, S, heads, d_k), 1, 2)

    return to_heads(q), to_heads(k), to_heads(v)


# --------------------------------------------------------------------------- main
if __name__ == "__main__":
    B, S, E, heads = 2, 8, 32, 4                # d_k = 8

    key = jax.random.PRNGKey(0)
    kx, kw = jax.random.split(key)
    x = jax.random.normal(kx, (B, S, E), jnp.float32)
    bound = 1.0 / math.sqrt(E)                  # PyTorch nn.Linear default init range
    w_qkv = jax.random.uniform(kw, (3 * E, E), jnp.float32, -bound, bound)

    # Exact f32 path.
    q, k, v = jax.block_until_ready(linear_premix_forward(x, w_qkv, heads))
    qr, kr, vr = linear_premix_reference(x, w_qkv, heads)
    assert q.shape == k.shape == v.shape == (B, heads, S, E // heads), q.shape
    for a, b in ((q, qr), (k, kr), (v, vr)):
        assert bool(jnp.allclose(a, b, rtol=1e-5, atol=1e-5)), \
            float(jnp.max(jnp.abs(a - b)))

    # bf16 HBM-operand fast path (f32 accumulation) -- the v5e/v6e/v7x perf setting.
    q16, k16, v16 = jax.block_until_ready(
        linear_premix_forward(x, w_qkv, heads, compute_dtype=jnp.bfloat16))
    for a, b in ((q16, qr), (k16, kr), (v16, vr)):
        assert bool(jnp.allclose(a, b, rtol=3e-2, atol=3e-2))

    assert bool(jnp.all(jnp.isfinite(q)) and jnp.all(jnp.isfinite(k))
                and jnp.all(jnp.isfinite(v)))
    print("KERNEL_OK")
</pallas_src>

<mosaic_0001>
module attributes {stable_mosaic.version = 11 : i64} {
  func.func @_qkv_kernel_fullk(%arg0: i32, %arg1: i32, %arg2: memref<16x32xf32, #tpu.memory_space<vmem>>, %arg3: memref<96x32xf32, #tpu.memory_space<vmem>>, %arg4: memref<16x96xf32, #tpu.memory_space<vmem>>) attributes {dimension_semantics = [#tpu.dimension_semantics<parallel>, #tpu.dimension_semantics<parallel>], iteration_bounds = array<i64: 1, 1>, scalar_prefetch = 0 : i64, scratch_operands = 0 : i64, tpu.core_type = #tpu.core_type<tc>, window_params = [{transform_indices = @transform_0, window_bounds = array<i64: 16, 32>}, {transform_indices = @transform_1, window_bounds = array<i64: 96, 32>}, {transform_indices = @transform_2, window_bounds = array<i64: 16, 96>}]} {
    %c0 = arith.constant 0 : index
    %c0_0 = arith.constant 0 : index
    %0 = vector.load %arg2[%c0, %c0_0] : memref<16x32xf32, #tpu.memory_space<vmem>>, vector<16x32xf32>
    %c0_1 = arith.constant 0 : index
    %c0_2 = arith.constant 0 : index
    %1 = vector.load %arg3[%c0_1, %c0_2] : memref<96x32xf32, #tpu.memory_space<vmem>>, vector<96x32xf32>
    %cst = arith.constant dense<0.000000e+00> : vector<16x96xf32>
    %2 = tpu.matmul %0, %1, %cst {dimension_numbers = #tpu.dot_dimension_numbers<[1], [1], [0], [0], [0, 0, 1, 0], [], []>} : vector<16x32xf32>, vector<96x32xf32>, vector<16x96xf32> -> vector<16x96xf32>
    %c0_3 = arith.constant 0 : index
    %c0_4 = arith.constant 0 : index
    %3 = vector.load %arg4[%c0_3, %c0_4] : memref<16x96xf32, #tpu.memory_space<vmem>>, vector<16x96xf32>
    tpu.vector_store %arg4[%c0_3, %c0_4], %2 {strides = array<i32>} : memref<16x96xf32, #tpu.memory_space<vmem>>, vector<16x96xf32>,
    return
  }
  func.func @transform_0(%arg0: i32, %arg1: i32) -> (i32, i32) {
    %c0_i32 = arith.constant 0 : i32
    %c0_i32_0 = arith.constant 0 : i32
    return %arg0, %c0_i32 : i32, i32
  }
  func.func @transform_1(%arg0: i32, %arg1: i32) -> (i32, i32) {
    %c0_i32 = arith.constant 0 : i32
    %c0_i32_0 = arith.constant 0 : i32
    return %arg1, %c0_i32 : i32, i32
  }
  func.func @transform_2(%arg0: i32, %arg1: i32) -> (i32, i32) {
    %c0_i32 = arith.constant 0 : i32
    return %arg0, %arg1 : i32, i32
  }
}

</mosaic_0001>

<llo_original>
// kernel: tpu_custom_call.1
$region0: #{tpu_custom_call.1}
  #allocation0 [shape = 'u32[]', space=smem, size = 0x4, offset = 0x4, fixed_abs, tag = 'smem constant byte address 0x4 - core index']
  #allocation1 [shape = 'u32[144,128]{1,0:T(1,128)}', space=vmem, size = 0x12000, scoped, tag = 'internal scratch']
  %s0 = inlined_call_operand.vmem [shape: f32[16,32], index: 0, kind: input, shape index: {}]
  %s1 = inlined_call_operand.vmem [shape: f32[96,32], index: 1, kind: input, shape index: {}]
  %s2 = inlined_call_operand.hbm [shape: f32[16,96], index: 2, kind: output, shape index: {}]
  %s3 = sld [smem:[#allocation0]]
  $region18: #{tpu_custom_call.1} parent=0
    _
  %s5 = ssub.s32 1, %s3
  %s6 = scalar_select 0, %s5, %s3
  $region1: #{tpu_custom_call.1} parent=0
    #allocation2 [shape = 'u8[8192]{0}', space=vmem, size = 0x2000, scoped, tag = 'output window, operand 0, single buffered']
    #allocation3 [shape = 's32[1]{0}', space=sflag, size = 0x4, scoped, tag = 'scoped memory for tpu_custom_call.1']
    %7 = vsyncpa [#allocation3], 0
    // Predicated region
    $region2: #{tpu_custom_call.1} parent=1 // pred_check
      _
    $region3: #{tpu_custom_call.1} parent=1 // pred_check_branch
      %9 = sbr.rel (0) target = $region5
    $region4: #{tpu_custom_call.1} parent=1 // pred_region
      _
    $region5: #{tpu_custom_call.1} parent=1 // pred_fallthru
      _
    // Predicated region
    $region6: #{tpu_custom_call.1} parent=1 // pred_check
      _
    $region7: #{tpu_custom_call.1} parent=1 // pred_check_branch
      %11 = sbr.rel (0) target = $region9
    $region8: #{tpu_custom_call.1} parent=1 // pred_region
      _
    $region9: #{tpu_custom_call.1} parent=1 // pred_fallthru
      _
    %v12 = vld [vmem:[%s0] sm:$0xff]
    %v13 = vld [vmem:[%s0 + $0x8] sm:$0xff]
    %v14 = vld [vmem:[%s1] sm:$0xff]
    %v15 = vld [vmem:[%s1 + $0x8] sm:$0xff]
    %v16 = vld [vmem:[%s1 + $0x10] sm:$0xff]
    %v17 = vld [vmem:[%s1 + $0x18] sm:$0xff]
    %v18 = vld [vmem:[%s1 + $0x20] sm:$0xff]
    %v19 = vld [vmem:[%s1 + $0x28] sm:$0xff]
    %v20 = vld [vmem:[%s1 + $0x30] sm:$0xff]
    %v21 = vld [vmem:[%s1 + $0x38] sm:$0xff]
    %v22 = vld [vmem:[%s1 + $0x40] sm:$0xff]
    %v23 = vld [vmem:[%s1 + $0x48] sm:$0xff]
    %v24 = vld [vmem:[%s1 + $0x50] sm:$0xff]
    %v25 = vld [vmem:[%s1 + $0x58] sm:$0xff]
    %vm26 = vcmask 261120
    %v28 = vsel %vm26, %v12, 0
    %v31 = vsel %vm26, %v13, 0
    %v34 = vsel %vm26, %v14, 0
    %v37 = vsel %vm26, %v15, 0
    %v40 = vsel %vm26, %v16, 0
    %v43 = vsel %vm26, %v17, 0
    %v46 = vsel %vm26, %v18, 0
    %v49 = vsel %vm26, %v19, 0
    %v52 = vsel %vm26, %v20, 0
    %v55 = vsel %vm26, %v21, 0
    %v58 = vsel %vm26, %v22, 0
    %v61 = vsel %vm26, %v23, 0
    %v64 = vsel %vm26, %v24, 0
    %v67 = vsel %vm26, %v25, 0
    %69 = vmatprep.subr.mxu0 0.0
    %70 = vmatpush1.xpose.msra.mxu0 %v34
    %71 = vmatprep.subr.mxu0 0.0
    %72 = vmatpush1.xpose.msra.mxu0 %v37
    %73 = vmatprep.subr.mxu0 0.0
    %74 = vmatpush1.xpose.msra.mxu0 %v40
    %75 = vmatprep.subr.mxu0 0.0
    %76 = vmatpush1.xpose.msra.mxu0 %v43
    %77 = vmatprep.subr.mxu0 0.0
    %78 = vmatpush1.xpose.msra.mxu0 %v46
    %79 = vmatprep.subr.mxu0 0.0
    %80 = vmatpush1.xpose.msra.mxu0 %v49
    %81 = vmatprep.subr.mxu0 0.0
    %82 = vmatpush1.xpose.msra.mxu0 %v52
    %83 = vmatprep.subr.mxu0 0.0
    %84 = vmatpush1.xpose.msra.mxu0 %v55
    %85 = vmatprep.subr.mxu0 0.0
    %86 = vmatpush1.xpose.msra.mxu0 %v58
    %87 = vmatprep.subr.mxu0 0.0
    %88 = vmatpush1.xpose.msra.mxu0 %v61
    %89 = vmatprep.subr.mxu0 0.0
    %90 = vmatpush1.xpose.msra.mxu0 %v64
    %91 = vmatprep.subr.mxu0 0.0
    %92 = vmatpush1.xpose.msra.mxu0 %v67
    %93 = vmatprep.subr.mxu0 0.0
    %94 = vmatpush1.xpose.msra.mxu0 0.0
    %95 = vmatprep.subr.mxu0 0.0
    %96 = vmatpush1.xpose.msra.mxu0 0.0
    %97 = vmatprep.subr.mxu0 0.0
    %98 = vmatpush1.xpose.msra.mxu0 0.0
    %99 = vmatprep.subr.mxu0 0.0
    %100 = vmatpush1.xpose.msra.mxu0 0.0
    %101 = vmatprep.subr.mxu0 0.0
    %102 = vmatpush1.xpose.msra.mxu0 0.0
    %103 = vmatprep.subr.mxu0 0.0
    %104 = vmatpush1.xpose.msra.mxu0 0.0
    %105 = vmatprep.subr.mxu0 0.0
    %106 = vmatpush1.xpose.msra.mxu0 0.0
    %107 = vmatprep.subr.mxu0 0.0
    %108 = vmatpush1.xpose.msra.mxu0 0.0
    %109 = vmatprep.subr.mxu0 0.0
    %110 = vmatpush1.xpose.msra.mxu0 0.0
    %111 = vmatprep.subr.mxu0 0.0
    %112 = vmatpush1.xpose.msra.mxu0 0.0
    %113 = vmatprep.subr.mxu0 0.0
    %114 = vmatpush1.xpose.msra.mxu0 0.0
    %115 = vmatprep.subr.mxu0 0.0
    %116 = vmatpush1.xpose.msra.mxu0 0.0
    %117 = vmatprep.subr.mxu0 0.0
    %118 = vmatpush1.xpose.msra.mxu0 0.0
    %119 = vmatprep.subr.mxu0 0.0
    %120 = vmatpush1.xpose.msra.mxu0 0.0
    %121 = vmatprep.subr.mxu0 0.0
    %122 = vmatpush1.xpose.msra.mxu0 0.0
    %123 = vmatprep.subr.mxu0 0.0
    %124 = vmatpush1.xpose.msra.mxu0 0.0
    %125 = vmatprep.subr.mxu0 0.0
    %126 = vmatpush1.xpose.msra.mxu0 0.0
    %127 = vmatprep.subr.mxu0 0.0
    %128 = vmatpush1.xpose.msra.mxu0 0.0
    %129 = vmatprep.subr.mxu0 0.0
    %130 = vmatpush1.xpose.msra.mxu0 0.0
    %131 = vmatprep.subr.mxu0 0.0
    %132 = vmatpush1.xpose.msra.mxu0 0.0
    %133 = vmatprep.mubr.f32.mxu0 0.0
    %134 = vmatmul.mubr.f32.gmra.mrb[0].mxu0 %v28
    %v135 = vpop.f32.mrb[0].mxu0
    %v136 = vadd.f32 0.0, %v135
    %v137 = vpop.f32.mrb[0].mxu0
    %138 = vmatprep.mubr.f32.mxu0 0.0
    %139 = vmatmul.mubr.f32.gmra.mrb[0].mxu0 %v31
    %v140 = vpop.f32.mrb[0].mxu0
    %v141 = vadd.f32 0.0, %v140
    %v142 = vpop.f32.mrb[0].mxu0
    %143 = vdwg.mxu0
    %vm144 = vcmask 785408
    %145 = vst.msk [vmem:[#allocation2] sm:$0xff] %vm144, %v136
    %146 = vst.msk [vmem:[#allocation2 + $0x8] sm:$0xff] %vm144, %v141
    // Predicated region
    $region10: #{tpu_custom_call.1} parent=1 // pred_check
      _
    $region11: #{tpu_custom_call.1} parent=1 // pred_check_branch
      %148 = sbr.rel (0) target = $region13
    $region12: #{tpu_custom_call.1} parent=1 // pred_region
      %s150 = ssub.s32 256, 256
      %151 = vsyncadd [#allocation3], %s150
      %s152 = sshll.u32 [#allocation2], 4
      %s153 = int_to_ptr.vmem [resolvable:$true] %s152
      %158 = dma.vmem_to_hbm [thread:$0]  %s153, 256, %s2, [#allocation3], 128, 128, 8
    $region13: #{tpu_custom_call.1} parent=1 // pred_fallthru
      _
    // Predicated region
    $region14: #{tpu_custom_call.1} parent=1 // pred_check
      _
    $region15: #{tpu_custom_call.1} parent=1 // pred_check_branch
      %160 = sbr.rel (0) target = $region17
    $region16: #{tpu_custom_call.1} parent=1 // pred_region
      %161 = dma.done [#allocation3], 256
    $region17: #{tpu_custom_call.1} parent=1 // pred_fallthru
      _
    %162 = vsyncpa [#allocation3], 1

</llo_original>
